<compile_context>
chip_gen: v5e
topology: v5e:2x2
jax: 0.10.0
libtpu: 0.0.40
codegen_flags: <defaults>
</compile_context>

<pallas_src>
import functools

import numpy as np
import jax
import jax.numpy as jnp
from jax import lax
from jax.experimental import pallas as pl
from jax.experimental.pallas import tpu as pltpu

HIGH = jax.lax.Precision.HIGHEST  # used only by the pure-JAX reference


def _vmem_limit_bytes():
    """Generation-aware VMEM budget (~75% of physical per-TC VMEM)."""
    try:
        info = pltpu.get_tpu_info()
        cap = getattr(info, "vmem_capacity_bytes", None)
        if cap:
            return max(32 * 1024 * 1024, int(cap) * 3 // 4)
    except Exception:
        pass
    return 48 * 1024 * 1024  # safe on every generation (v7x physical VMEM is 64 MiB)


# ---------- Kernel A: 1x1 conv1 (BN folded) + ReLU, NCHW in -> channels-last bf16 out --
def _conv1_bn_relu_kernel(x_ref, w_ref, b_ref, o_ref, *, H, W):
    x = x_ref[...]                                   # (C, H*W) f32, NCHW frame
    xt = jnp.transpose(x)                            # (H*W, C) - XLU, hidden under DMA
    y = jnp.dot(xt.astype(jnp.bfloat16), w_ref[...],
                preferred_element_type=jnp.float32)  # (H*W, Cout) f32
    y = jnp.maximum(y + b_ref[...], 0.0)
    o_ref[...] = y.astype(jnp.bfloat16).reshape(H, W, -1)


# ---------- Kernel BC: per-video temporal diffs + gates + apply (fully fused) ----------
def _video_diff_gate_apply_kernel(feat_ref, w2p_ref, wht1_ref, wht2_ref,
                                  wwt1_ref, wwt2_ref, o_ref,
                                  xp_ref, dsum_ref, swacc_ref, d_ref,
                                  *, T, H, W, C):
    T1 = T - 1
    inv_t1 = 1.0 / T1

    # Zero the halo of the padded scratch (border only; interior rewritten per frame).
    zrow = jnp.zeros((1, W + 2, C), jnp.bfloat16)
    zcol = jnp.zeros((H, 1, C), jnp.bfloat16)
    xp_ref[0:1, :, :] = zrow
    xp_ref[H + 1:H + 2, :, :] = zrow
    xp_ref[1:1 + H, 0:1, :] = zcol
    xp_ref[1:1 + H, W + 1:W + 2, :] = zcol

    a = wht1_ref[...]                                # (3, C) depthwise h-gate taps
    b = wwt1_ref[...]                                # (3, C) depthwise w-gate taps
    base_alpha = (b[0] + b[1] + b[2] + 1.0) * inv_t1  # per-channel sw-accum coefficient

    # ---- stream the T1 diffs; keep only dsum and the closed-form sw accumulator ------
    for i in range(T1):
        # diff_i = feat[i] - conv2_3x3(feat[i+1]); next frame goes through the halo pad.
        xp_ref[1:1 + H, 1:1 + W, :] = feat_ref[i + 1]
        acc = jnp.zeros((H * W, C), jnp.float32)
        for kx in range(3):
            # ky shifts are free leading-axis slices; lane-concat them -> K = 3C matmul.
            win = jnp.concatenate(
                [xp_ref[ky:ky + H, kx:kx + W, :] for ky in range(3)], axis=-1)
            acc = acc + jnp.dot(win.reshape(H * W, 3 * C), w2p_ref[kx],
                                preferred_element_type=jnp.float32)
        d_ref[...] = feat_ref[i].astype(jnp.float32) - acc.reshape(H, W, C)

        # mean over t1 of (conv_wt1(d) + d) in closed form:
        #   ((b0+b1+b2)*sum_t d - b0*d[T1-1] - b2*d[0]) / t1 + mean_t d
        alpha = base_alpha
        if i == 0:
            alpha = alpha - b[2] * inv_t1
        if i == T1 - 1:
            alpha = alpha - b[0] * inv_t1
        if i == 0:
            dsum_ref[...] = d_ref[...]
            swacc_ref[...] = alpha * d_ref[...]
        else:
            dsum_ref[...] += d_ref[...]
            swacc_ref[...] += alpha * d_ref[...]

    # ---- gates -----------------------------------------------------------------------
    dm = dsum_ref[...] * inv_t1                      # (H, W, C) mean over t1
    zero_row = jnp.zeros((1, W, C), jnp.float32)
    up = jnp.concatenate([zero_row, dm[:H - 1]], axis=0)    # dm[y-1], zero-padded
    down = jnp.concatenate([dm[1:], zero_row], axis=0)      # dm[y+1], zero-padded
    sh = up * a[0] + dm * (a[1] + 1.0) + down * a[2]        # conv_ht1 + residual on mean
    sw = swacc_ref[...]

    yh = jnp.dot(sh.reshape(H * W, C).astype(jnp.bfloat16), wht2_ref[...],
                 preferred_element_type=jnp.float32)
    yw = jnp.dot(sw.reshape(H * W, C).astype(jnp.bfloat16), wwt2_ref[...],
                 preferred_element_type=jnp.float32)
    gate = jax.nn.sigmoid(yh) * jax.nn.sigmoid(yw) + 1.0    # (H*W, C) f32

    # ---- apply per frame and write NCHW directly (transpose folded in) ----------------
    for i in range(T):
        yi = feat_ref[i].astype(jnp.float32).reshape(H * W, C) * gate
        o_ref[i] = jnp.transpose(yi)                 # (C, H*W)


# ======================================================================================
def intra_sma_forward(x_nchw, params, *, u, t):
    """IntraSMA forward. x_nchw: (b*u*t, C, H, W) float32, returns same shape (NCHW)."""
    del u  # not used by the math (bu = but // t)
    but, C, H, W = x_nchw.shape
    assert t >= 2, "IntraSMA needs at least two frames per video (t >= 2)"
    assert but % t == 0
    bu = but // t
    HW = H * W

    # Layout-preserving reshapes only (no HBM transpose passes).
    x3 = x_nchw.reshape(but, C, HW).astype(jnp.float32)

    # --- parameters in kernel-friendly layouts (BN folded, matmul weights bf16) -------
    inv_std = params["bn_gamma"] / jnp.sqrt(params["bn_var"] + params["bn_eps"])
    w1 = (params["w_conv1"][:, :, 0, 0].T * inv_std[None, :]).astype(jnp.bfloat16)
    bias = (params["bn_beta"] - params["bn_mean"] * inv_std).reshape(1, C)
    bias = bias.astype(jnp.float32)
    w2r = jnp.transpose(params["w_conv2"], (2, 3, 1, 0))            # (ky, kx, Cin, Cout)
    w2p = jnp.transpose(w2r, (1, 0, 2, 3)).reshape(3, 3 * C, C)     # (kx, ky*Cin, Cout)
    w2p = w2p.astype(jnp.bfloat16)
    wht1 = params["w_ht1"][:, 0, :, 0].T.astype(jnp.float32)        # (3, C) VPU taps
    wwt1 = params["w_wt1"][:, 0, :, 0].T.astype(jnp.float32)
    wht2 = params["w_ht2"][:, :, 0, 0].T.astype(jnp.bfloat16)       # (Cin, Cout)
    wwt2 = params["w_wt2"][:, :, 0, 0].T.astype(jnp.bfloat16)

    vmem_lim = _vmem_limit_bytes()

    # --- Kernel A: feat(bf16, NHWC) = relu(conv1(x) * bn_scale + bn_bias) -------------
    feat = pl.pallas_call(
        functools.partial(_conv1_bn_relu_kernel, H=H, W=W),
        out_shape=jax.ShapeDtypeStruct((but, H, W, C), jnp.bfloat16),
        grid=(but,),
        in_specs=[pl.BlockSpec((None, C, HW), lambda n: (n, 0, 0)),
                  pl.BlockSpec((C, C), lambda n: (0, 0)),
                  pl.BlockSpec((1, C), lambda n: (0, 0))],
        out_specs=pl.BlockSpec((None, H, W, C), lambda n: (n, 0, 0, 0)),
        compiler_params=pltpu.CompilerParams(
            dimension_semantics=("parallel",), vmem_limit_bytes=vmem_lim),
    )(x3, w1, bias)

    feat5 = feat.reshape(bu, t, H, W, C)            # leading-dim split: free

    # --- Kernel BC: per-video diffs + gates + apply, NCHW f32 output ------------------
    out = pl.pallas_call(
        functools.partial(_video_diff_gate_apply_kernel, T=t, H=H, W=W, C=C),
        out_shape=jax.ShapeDtypeStruct((bu, t, C, HW), jnp.float32),
        grid=(bu,),
        in_specs=[
            pl.BlockSpec((None, t, H, W, C), lambda b: (b, 0, 0, 0, 0)),
            pl.BlockSpec((3, 3 * C, C), lambda b: (0, 0, 0)),
            pl.BlockSpec((3, C), lambda b: (0, 0)),
            pl.BlockSpec((C, C), lambda b: (0, 0)),
            pl.BlockSpec((3, C), lambda b: (0, 0)),
            pl.BlockSpec((C, C), lambda b: (0, 0)),
        ],
        out_specs=pl.BlockSpec((None, t, C, HW), lambda b: (b, 0, 0, 0)),
        scratch_shapes=[pltpu.VMEM((H + 2, W + 2, C), jnp.bfloat16),   # padded frame
                        pltpu.VMEM((H, W, C), jnp.float32),            # dsum
                        pltpu.VMEM((H, W, C), jnp.float32),            # sw accumulator
                        pltpu.VMEM((H, W, C), jnp.float32)],           # current diff
        compiler_params=pltpu.CompilerParams(
            dimension_semantics=("parallel",), vmem_limit_bytes=vmem_lim),
    )(feat5, w2p, wht1, wht2, wwt1, wwt2)

    return out.reshape(but, C, H, W)                # trailing-dim split: free


# ======================================================================================
# Pure-JAX reference (mirrors the PyTorch forward op-for-op) for a correctness check.
def _conv_nchw(x, w, pad, groups=1):
    return lax.conv_general_dilated(
        x, w, window_strides=(1, 1),
        padding=((pad[0], pad[0]), (pad[1], pad[1])),
        dimension_numbers=("NCHW", "OIHW", "NCHW"),
        feature_group_count=groups, precision=HIGH)


def reference_forward(x, p, *, u, t):
    but, C, H, W = x.shape
    y = _conv_nchw(x, p["w_conv1"], (0, 0))
    inv = (p["bn_gamma"] / jnp.sqrt(p["bn_var"] + p["bn_eps"]))[None, :, None, None]
    y = (y - p["bn_mean"][None, :, None, None]) * inv + p["bn_beta"][None, :, None, None]
    y = jnp.maximum(y, 0.0)

    feat = y.reshape(-1, t, C, H, W).transpose(1, 0, 2, 3, 4)        # (t, bu, C, H, W)
    t1 = t - 1
    tl = [feat[i] - _conv_nchw(feat[i + 1], p["w_conv2"], (1, 1)) for i in range(t1)]
    fs = jnp.stack(tl, axis=0)                                        # (t1, bu, C, H, W)

    dh = fs.transpose(1, 4, 2, 3, 0).reshape(-1, C, H, t1)
    dh = _conv_nchw(_conv_nchw(dh, p["w_ht1"], (1, 0), groups=C) + dh, p["w_ht2"], (0, 0))
    dw = fs.transpose(1, 3, 2, 0, 4).reshape(-1, C, t1, W)
    dw = _conv_nchw(_conv_nchw(dw, p["w_wt1"], (1, 0), groups=C) + dw, p["w_wt2"], (0, 0))

    dh = jax.nn.sigmoid(jnp.mean(dh, axis=-1, keepdims=True)).reshape(-1, W, C, H, 1)
    dh = dh.transpose(0, 4, 2, 3, 1)                                  # (bu, 1, C, H, W)
    dw = jax.nn.sigmoid(jnp.mean(dw, axis=-2, keepdims=True)).reshape(-1, H, C, 1, W)
    dw = dw.transpose(0, 3, 2, 1, 4)                                  # (bu, 1, C, H, W)
    # second branch of the reference is numerically identical (stack(t_list)) -> skip.

    x2_ = y.reshape(-1, t, C, H, W)
    sma1 = (dh * dw * x2_).reshape(but, C, H, W)
    return sma1 + y


# ======================================================================================
if __name__ == "__main__":
    B, U, T = 1, 2, 4
    C, H, W = 128, 16, 16
    BUT = B * U * T

    key = jax.random.PRNGKey(0)
    kx, kp = jax.random.split(key)
    x = jax.random.normal(kx, (BUT, C, H, W), jnp.float32)

    ks = jax.random.split(kp, 10)
    params = {
        "w_conv1": 0.06 * jax.random.normal(ks[0], (C, C, 1, 1), jnp.float32),
        "w_conv2": 0.02 * jax.random.normal(ks[1], (C, C, 3, 3), jnp.float32),
        "w_ht1":   0.30 * jax.random.normal(ks[2], (C, 1, 3, 1), jnp.float32),
        "w_ht2":   0.05 * jax.random.normal(ks[3], (C, C, 1, 1), jnp.float32),
        "w_wt1":   0.30 * jax.random.normal(ks[4], (C, 1, 3, 1), jnp.float32),
        "w_wt2":   0.05 * jax.random.normal(ks[5], (C, C, 1, 1), jnp.float32),
        "bn_gamma": 1.0 + 0.1 * jax.random.normal(ks[6], (C,), jnp.float32),
        "bn_beta":  0.1 * jax.random.normal(ks[7], (C,), jnp.float32),
        "bn_mean":  0.1 * jax.random.normal(ks[8], (C,), jnp.float32),
        "bn_var":   1.0 + 0.1 * jnp.abs(jax.random.normal(ks[9], (C,), jnp.float32)),
        "bn_eps":   1e-5,
    }

    out = jax.block_until_ready(intra_sma_forward(x, params, u=U, t=T))
    ref = jax.block_until_ready(reference_forward(x, params, u=U, t=T))
    # bf16 MXU operands + bf16 feat storage vs HIGHEST-precision f32 reference -> 3e-2.
    np.testing.assert_allclose(np.asarray(out), np.asarray(ref), rtol=3e-2, atol=3e-2)
    print("KERNEL_OK")
</pallas_src>

<mosaic_0001>
module attributes {stable_mosaic.version = 11 : i64} {
  func.func @_conv1_bn_relu_kernel(%arg0: i32, %arg1: memref<1x128x256xf32, #tpu.memory_space<vmem>>, %arg2: memref<128x128xbf16, #tpu.memory_space<vmem>>, %arg3: memref<1x128xf32, #tpu.memory_space<vmem>>, %arg4: memref<1x16x16x128xbf16, #tpu.memory_space<vmem>>) attributes {dimension_semantics = [#tpu.dimension_semantics<parallel>], iteration_bounds = array<i64: 8>, scalar_prefetch = 0 : i64, scratch_operands = 0 : i64, tpu.core_type = #tpu.core_type<tc>, window_params = [{transform_indices = @transform_0, window_bounds = array<i64: 1, 128, 256>}, {pipeline_mode = #tpu.pipeline_mode<synchronous>, transform_indices = @transform_1, window_bounds = array<i64: 128, 128>}, {pipeline_mode = #tpu.pipeline_mode<synchronous>, transform_indices = @transform_2, window_bounds = array<i64: 1, 128>}, {transform_indices = @transform_3, window_bounds = array<i64: 1, 16, 16, 128>}]} {
    %c0 = arith.constant 0 : index
    %c0_0 = arith.constant 0 : index
    %c0_1 = arith.constant 0 : index
    %0 = vector.load %arg1[%c0, %c0_0, %c0_1] : memref<1x128x256xf32, #tpu.memory_space<vmem>>, vector<1x128x256xf32>
    %1 = vector.shape_cast %0 : vector<1x128x256xf32> to vector<128x256xf32>
    %2 = tpu.transpose %1, [1, 0] : vector<128x256xf32> -> vector<256x128xf32>
    %3 = arith.truncf %2 : vector<256x128xf32> to vector<256x128xbf16>
    %c0_2 = arith.constant 0 : index
    %c0_3 = arith.constant 0 : index
    %4 = vector.load %arg2[%c0_2, %c0_3] : memref<128x128xbf16, #tpu.memory_space<vmem>>, vector<128x128xbf16>
    %cst = arith.constant dense<0.000000e+00> : vector<256x128xf32>
    %5 = tpu.matmul %3, %4, %cst {dimension_numbers = #tpu.dot_dimension_numbers<[1], [0], [0], [1], [0, 0, 1, 1], [], []>} : vector<256x128xbf16>, vector<128x128xbf16>, vector<256x128xf32> -> vector<256x128xf32>
    %c0_4 = arith.constant 0 : index
    %c0_5 = arith.constant 0 : index
    %6 = vector.load %arg3[%c0_4, %c0_5] : memref<1x128xf32, #tpu.memory_space<vmem>>, vector<1x128xf32>
    %7 = vector.broadcast %6 : vector<1x128xf32> to vector<256x128xf32>
    %8 = arith.addf %5, %7 : vector<256x128xf32>
    %cst_6 = arith.constant 0.000000e+00 : f32
    %9 = vector.broadcast %cst_6 : f32 to vector<256x128xf32>
    %10 = arith.maximumf %8, %9 : vector<256x128xf32>
    %11 = arith.truncf %10 : vector<256x128xf32> to vector<256x128xbf16>
    %12 = vector.shape_cast %11 : vector<256x128xbf16> to vector<16x16x128xbf16>
    %c0_7 = arith.constant 0 : index
    %c0_8 = arith.constant 0 : index
    %c0_9 = arith.constant 0 : index
    %c0_10 = arith.constant 0 : index
    %13 = vector.load %arg4[%c0_7, %c0_8, %c0_9, %c0_10] : memref<1x16x16x128xbf16, #tpu.memory_space<vmem>>, vector<1x16x16x128xbf16>
    %14 = vector.shape_cast %13 : vector<1x16x16x128xbf16> to vector<16x16x128xbf16>
    %15 = vector.shape_cast %12 : vector<16x16x128xbf16> to vector<1x16x16x128xbf16>
    tpu.vector_store %arg4[%c0_7, %c0_8, %c0_9, %c0_10], %15 {strides = array<i32>} : memref<1x16x16x128xbf16, #tpu.memory_space<vmem>>, vector<1x16x16x128xbf16>,
    return
  }
  func.func @transform_0(%arg0: i32) -> (i32, i32, i32) {
    %c0_i32 = arith.constant 0 : i32
    %c0_i32_0 = arith.constant 0 : i32
    %c0_i32_1 = arith.constant 0 : i32
    return %arg0, %c0_i32, %c0_i32_0 : i32, i32, i32
  }
  func.func @transform_1(%arg0: i32) -> (i32, i32) {
    %c0_i32 = arith.constant 0 : i32
    %c0_i32_0 = arith.constant 0 : i32
    %c0_i32_1 = arith.constant 0 : i32
    return %c0_i32, %c0_i32_0 : i32, i32
  }
  func.func @transform_2(%arg0: i32) -> (i32, i32) {
    %c0_i32 = arith.constant 0 : i32
    %c0_i32_0 = arith.constant 0 : i32
    %c0_i32_1 = arith.constant 0 : i32
    return %c0_i32, %c0_i32_0 : i32, i32
  }
  func.func @transform_3(%arg0: i32) -> (i32, i32, i32, i32) {
    %c0_i32 = arith.constant 0 : i32
    %c0_i32_0 = arith.constant 0 : i32
    %c0_i32_1 = arith.constant 0 : i32
    %c0_i32_2 = arith.constant 0 : i32
    return %arg0, %c0_i32, %c0_i32_0, %c0_i32_1 : i32, i32, i32, i32
  }
}

</mosaic_0001>

<llo_original>
// kernel: tpu_custom_call.1
$region0: #{tpu_custom_call.1}
  #allocation0 [shape = 'u32[]', space=smem, size = 0x4, offset = 0x4, fixed_abs, tag = 'smem constant byte address 0x4 - core index']
  #allocation1 [shape = 'u32[72,128]{1,0:T(1,128)}', space=vmem, size = 0x9000, scoped, tag = 'internal scratch']
  %s0 = inlined_call_operand.hbm [shape: f32[8,128,256], index: 0, kind: input, shape index: {}]
  %s1 = inlined_call_operand.hbm [shape: bf16[128,128], index: 1, kind: input, shape index: {}]
  %s2 = inlined_call_operand.vmem [shape: f32[1,128], index: 2, kind: input, shape index: {}]
  %s3 = inlined_call_operand.hbm [shape: bf16[8,16,16,128], index: 3, kind: output, shape index: {}]
  %s4 = sld [smem:[#allocation0]]
  $region53: #{tpu_custom_call.1} parent=0
    _
  %s6 = ssub.s32 1, %s4
  %s7 = scalar_select 0, %s6, %s4
  $region1: #{tpu_custom_call.1} parent=0
    #allocation2 [shape = 'u8[262144]{0}', space=vmem, size = 0x40000, scoped, tag = 'input window, operand 0']
    #allocation3 [shape = 's32[2]{0}', space=sflag, size = 0x8, scoped, tag = 'scoped memory for tpu_custom_call.1']
    #allocation4 [shape = 's32[2]{0}', space=sflag, size = 0x8, scoped, tag = 'scoped memory for tpu_custom_call.1']
    #allocation5 [shape = 'u8[32768]{0}', space=vmem, size = 0x8000, scoped, tag = 'input window, operand 1, single buffered']
    #allocation6 [shape = 's32[1]{0}', space=sflag, size = 0x4, scoped, tag = 'scoped memory for tpu_custom_call.1']
    #allocation7 [shape = 'u8[131072]{0}', space=vmem, size = 0x20000, scoped, tag = 'output window, operand 0']
    %8 = vsyncpa [#allocation3], 0
    %s9 = scalar_lea.sflag [#allocation3], 1
    %10 = vsyncpa %s9, 0
    %11 = vsyncpa [#allocation6], 0
    %12 = vsyncpa [#allocation4], 0
    %s13 = scalar_lea.sflag [#allocation4], 1
    %14 = vsyncpa %s13, 0
    loop: start=0, step=1, limit=10
    $region2: #{tpu_custom_call.1} parent=1 // loop_pre_header
      _
    $region3: #{tpu_custom_call.1} parent=1 // loop_header
      %s16 = sphi 0, %s20
      %p17 = scmp.ge.s32.totalorder %s16, 10
      %s26 = sphi 0, %s28
      %s29 = sphi 0, %s26
      %s30 = sphi 0, %s29
      %s46 = sphi 0, %s30
      %s50 = sphi 0, %s50
      %s52 = sphi 0, %s50
      %s53 = sphi 0, %s52
      %s67 = sphi 0, %s53
      %s71 = sphi 0, %s71
      %s73 = sphi 0, %s71
      %s74 = sphi 0, %s73
      %s88 = sphi 0, %s74
      %s94 = sphi 0, %s96
      %s97 = sphi 0, %s94
      %s98 = sphi 0, %s97
      %s114 = sphi 0, %s98
    $region4: #{tpu_custom_call.1} parent=1 // loop_header_branch
      %19 = sbr.rel (%p17) target = $region8
    $region5: #{tpu_custom_call.1} parent=1 // loop_body
      %s21 = ssub.s32 %s16, 1
      %s22 = ssub.s32 %s16, 2
      %s23 = sadd.s32 %s16, 1
      %s24 = ssub.s32 %s16, %s23
      %p25 = scmp.eq.s32.totalorder %s24, 0
      %s27 = sadd.s32 %s26, 1
      %s28 = scalar_select %p25, %s26, %s27
      %p31 = pneg %p25
      %p32 = scmp.eq.s32.totalorder %s16, 7
      %p33 = por %p31, %p32
      %p34 = scmp.ne.s32.totalorder %s26, %s29
      %p35 = scmp.eq.s32.totalorder %s16, 0
      %p36 = por %p34, %p35
      %p37 = scmp.ne.s32.totalorder %s26, %s29
      %p38 = scmp.eq.s32.totalorder %s21, 7
      %p39 = por %p37, %p38
      %p40 = scmp.ne.s32.totalorder %s29, %s30
      %p41 = scmp.eq.s32.totalorder %s21, 0
      %p42 = por %p40, %p41
      %p43 = scmp.ne.s32.totalorder %s29, %s30
      %p44 = scmp.eq.s32.totalorder %s22, 7
      %p45 = por %p43, %p44
      %p47 = scmp.ne.s32.totalorder %s30, %s46
      %p48 = scmp.eq.s32.totalorder %s22, 0
      %p49 = por %p47, %p48
      %s51 = sadd.s32 %s50, 1
      %p54 = scmp.eq.s32.totalorder %s16, 7
      %p55 = scmp.ne.s32.totalorder %s50, %s52
      %p56 = scmp.eq.s32.totalorder %s16, 0
      %p57 = por %p55, %p56
      %p58 = scmp.ne.s32.totalorder %s50, %s52
      %p59 = scmp.eq.s32.totalorder %s21, 7
      %p60 = por %p58, %p59
      %p61 = scmp.ne.s32.totalorder %s52, %s53
      %p62 = scmp.eq.s32.totalorder %s21, 0
      %p63 = por %p61, %p62
      %p64 = scmp.ne.s32.totalorder %s52, %s53
      %p65 = scmp.eq.s32.totalorder %s22, 7
      %p66 = por %p64, %p65
      %p68 = scmp.ne.s32.totalorder %s53, %s67
      %p69 = scmp.eq.s32.totalorder %s22, 0
      %p70 = por %p68, %p69
      %s72 = sadd.s32 %s71, 1
      %p75 = scmp.eq.s32.totalorder %s16, 7
      %p76 = scmp.ne.s32.totalorder %s71, %s73
      %p77 = scmp.eq.s32.totalorder %s16, 0
      %p78 = por %p76, %p77
      %p79 = scmp.ne.s32.totalorder %s71, %s73
      %p80 = scmp.eq.s32.totalorder %s21, 7
      %p81 = por %p79, %p80
      %p82 = scmp.ne.s32.totalorder %s73, %s74
      %p83 = scmp.eq.s32.totalorder %s21, 0
      %p84 = por %p82, %p83
      %p85 = scmp.ne.s32.totalorder %s73, %s74
      %p86 = scmp.eq.s32.totalorder %s22, 7
      %p87 = por %p85, %p86
      %p89 = scmp.ne.s32.totalorder %s74, %s88
      %p90 = scmp.eq.s32.totalorder %s22, 0
      %p91 = por %p89, %p90
      %s92 = ssub.s32 %s16, %s23
      %p93 = scmp.eq.s32.totalorder %s92, 0
      %s95 = sadd.s32 %s94, 1
      %s96 = scalar_select %p93, %s94, %s95
      %p99 = pneg %p93
      %p100 = scmp.eq.s32.totalorder %s16, 7
      %p101 = por %p99, %p100
      %p102 = scmp.ne.s32.totalorder %s94, %s97
      %p103 = scmp.eq.s32.totalorder %s16, 0
      %p104 = por %p102, %p103
      %p105 = scmp.ne.s32.totalorder %s94, %s97
      %p106 = scmp.eq.s32.totalorder %s21, 7
      %p107 = por %p105, %p106
      %p108 = scmp.ne.s32.totalorder %s97, %s98
      %p109 = scmp.eq.s32.totalorder %s21, 0
      %p110 = por %p108, %p109
      %p111 = scmp.ne.s32.totalorder %s97, %s98
      %p112 = scmp.eq.s32.totalorder %s22, 7
      %p113 = por %p111, %p112
      %p115 = scmp.ne.s32.totalorder %s98, %s114
      %p116 = scmp.eq.s32.totalorder %s22, 0
      %p117 = por %p115, %p116
      %p118 = scmp.le.s32.totalorder 1, %s16
      %p119 = scmp.lt.s32.totalorder %s16, 9
      %p120 = pnand %p118, %p119
      %p121 = pneg %p120
      // Predicated region
      $region9: #{tpu_custom_call.1} parent=5 // pred_check
        _
      $region10: #{tpu_custom_call.1} parent=5 // pred_check_branch
        %123 = sbr.rel (%p120) target = $region12
      $region11: #{tpu_custom_call.1} parent=5 // pred_region
        %s124 = ssub.s32 %s16, 1
        // Predicated region
        $region13: #{tpu_custom_call.1} parent=11 // pred_check
          %p125 = pneg %p63
        $region14: #{tpu_custom_call.1} parent=11 // pred_check_branch
          %127 = sbr.rel (%p125) target = $region16
        $region15: #{tpu_custom_call.1} parent=11 // pred_region
          %129 = vsyncadd [#allocation6], 0
          %s130 = sshll.u32 %s1, 4
          %s131 = int_to_ptr.hbm [resolvable:$true] %s130
          %s132 = sshll.u32 [#allocation5], 4
          %s133 = int_to_ptr.vmem [resolvable:$true] %s132
          %138 = dma.hbm_to_vmem [thread:$0]  %s131, 1024, %s133, [#allocation6], 64, 64, 4
        $region16: #{tpu_custom_call.1} parent=11 // pred_fallthru
          _
        // Predicated region
        $region17: #{tpu_custom_call.1} parent=11 // pred_check
          %p139 = pneg %p84
        $region18: #{tpu_custom_call.1} parent=11 // pred_check_branch
          %141 = sbr.rel (%p139) target = $region20
        $region19: #{tpu_custom_call.1} parent=11 // pred_region
          _
        $region20: #{tpu_custom_call.1} parent=11 // pred_fallthru
          _
      $region12: #{tpu_custom_call.1} parent=5 // pred_fallthru
        _
      %p142 = scmp.lt.s32.totalorder %s16, 8
      // Predicated region
      $region21: #{tpu_custom_call.1} parent=5 // pred_check
        %p143 = pneg %p142
      $region22: #{tpu_custom_call.1} parent=5 // pred_check_branch
        %145 = sbr.rel (%p143) target = $region24
      $region23: #{tpu_custom_call.1} parent=5 // pred_region
        // Predicated region
        $region25: #{tpu_custom_call.1} parent=23 // pred_check
          %p146 = pneg %p36
        $region26: #{tpu_custom_call.1} parent=23 // pred_check_branch
          %148 = sbr.rel (%p146) target = $region28
        $region27: #{tpu_custom_call.1} parent=23 // pred_region
          %s149 = sand.u32 %s26, 1
          %s150 = scalar_lea.sflag [#allocation3], %s149
          %s151 = sand.u32 %s26, 1
          %s152 = smul.addr %s151, 256
          %s153 = scalar_lea.vmem [#allocation2], %s152
          %155 = vsyncadd %s150, 0
          %s156 = smul.addr %s16, 32
          %s157 = smul.addr %s156, 8
          %s158 = scalar_lea.hbm %s0, %s157
          %s159 = sshll.u32 %s158, 4
          %s160 = int_to_ptr.hbm [resolvable:$true] %s159
          %s161 = sshll.u32 %s153, 4
          %s162 = int_to_ptr.vmem [resolvable:$true] %s161
          %167 = dma.hbm_to_vmem [thread:$0]  %s160, 4096, %s162, %s150, 256, 256, 16
        $region28: #{tpu_custom_call.1} parent=23 // pred_fallthru
          _
      $region24: #{tpu_custom_call.1} parent=5 // pred_fallthru
        _
      %p168 = scmp.le.s32.totalorder 1, %s16
      %p169 = scmp.lt.s32.totalorder %s16, 9
      %p170 = pnand %p168, %p169
      %p171 = pneg %p170
      // Predicated region
      $region29: #{tpu_custom_call.1} parent=5 // pred_check
        _
      $region30: #{tpu_custom_call.1} parent=5 // pred_check_branch
        %173 = sbr.rel (%p170) target = $region32
      $region31: #{tpu_custom_call.1} parent=5 // pred_region
        %s174 = ssub.s32 %s16, 1
        %s175 = sand.u32 %s29, 1
        %s176 = scalar_lea.sflag [#allocation3], %s175
        %s177 = sand.u32 %s29, 1
        %s178 = smul.addr %s177, 256
        %s179 = scalar_lea.vmem [#allocation2], %s178
        // Predicated region
        $region33: #{tpu_custom_call.1} parent=31 // pred_check
          %p180 = pneg %p42
        $region34: #{tpu_custom_call.1} parent=31 // pred_check_branch
          %182 = sbr.rel (%p180) target = $region36
        $region35: #{tpu_custom_call.1} parent=31 // pred_region
          %184 = dma.done %s176, 4096
        $region36: #{tpu_custom_call.1} parent=31 // pred_fallthru
          _
        // Predicated region
        $region37: #{tpu_custom_call.1} parent=31 // pred_check
          %p185 = pneg %p63
        $region38: #{tpu_custom_call.1} parent=31 // pred_check_branch
          %187 = sbr.rel (%p185) target = $region40
        $region39: #{tpu_custom_call.1} parent=31 // pred_region
          %189 = dma.done [#allocation6], 1024
        $region40: #{tpu_custom_call.1} parent=31 // pred_fallthru
          _
        %s190 = sand.u32 %s29, 1
        %s191 = scalar_lea.sflag [#allocation3], %s190
        %s192 = sand.u32 %s29, 1
        %s193 = smul.addr %s192, 256
        %s194 = scalar_lea.vmem [#allocation2], %s193
        %p195 = pneg %p42
        %p196 = pneg %p39
        %p197 = pneg %p63
        %p198 = pneg %p60
        %p199 = pneg %p84
        %p200 = pneg %p81
        %p201 = pneg %p110
        %p202 = pneg %p107
        %s203 = sand.u32 %s97, 1
        %s204 = scalar_lea.sflag [#allocation4], %s203
        %s205 = sand.u32 %s97, 1
        %s206 = smul.addr %s205, 128
        %s207 = scalar_lea.vmem [#allocation7], %s206
        %v208 = vld [vmem:[%s179] sm:$0xff]
        %v209 = vld [vmem:[%s179 + $0x8] sm:$0xff]
        %v210 = vld [vmem:[%s179 + $0x10] sm:$0xff]
        %v211 = vld [vmem:[%s179 + $0x18] sm:$0xff]
        %v212 = vld [vmem:[%s179 + $0x20] sm:$0xff]
        %v213 = vld [vmem:[%s179 + $0x28] sm:$0xff]
        %v214 = vld [vmem:[%s179 + $0x30] sm:$0xff]
        %v215 = vld [vmem:[%s179 + $0x38] sm:$0xff]
        %v216 = vld [vmem:[%s179 + $0x40] sm:$0xff]
        %v217 = vld [vmem:[%s179 + $0x48] sm:$0xff]
        %v218 = vld [vmem:[%s179 + $0x50] sm:$0xff]
        %v219 = vld [vmem:[%s179 + $0x58] sm:$0xff]
        %v220 = vld [vmem:[%s179 + $0x60] sm:$0xff]
        %v221 = vld [vmem:[%s179 + $0x68] sm:$0xff]
        %v222 = vld [vmem:[%s179 + $0x70] sm:$0xff]
        %v223 = vld [vmem:[%s179 + $0x78] sm:$0xff]
        %v224 = vld [vmem:[%s179 + $0x80] sm:$0xff]
        %v225 = vld [vmem:[%s179 + $0x88] sm:$0xff]
        %v226 = vld [vmem:[%s179 + $0x90] sm:$0xff]
        %v227 = vld [vmem:[%s179 + $0x98] sm:$0xff]
        %v228 = vld [vmem:[%s179 + $0xa0] sm:$0xff]
        %v229 = vld [vmem:[%s179 + $0xa8] sm:$0xff]
        %v230 = vld [vmem:[%s179 + $0xb0] sm:$0xff]
        %v231 = vld [vmem:[%s179 + $0xb8] sm:$0xff]
        %v232 = vld [vmem:[%s179 + $0xc0] sm:$0xff]
        %v233 = vld [vmem:[%s179 + $0xc8] sm:$0xff]
        %v234 = vld [vmem:[%s179 + $0xd0] sm:$0xff]
        %v235 = vld [vmem:[%s179 + $0xd8] sm:$0xff]
        %v236 = vld [vmem:[%s179 + $0xe0] sm:$0xff]
        %v237 = vld [vmem:[%s179 + $0xe8] sm:$0xff]
        %v238 = vld [vmem:[%s179 + $0xf0] sm:$0xff]
        %v239 = vld [vmem:[%s179 + $0xf8] sm:$0xff]
        %240 = vxpose.xlu0.b32.start [1/16] %v208, 128
        %241 = vxpose.xlu0.b32.cont [2/16] %v210, 128
        %242 = vxpose.xlu0.b32.cont [3/16] %v212, 128
        %243 = vxpose.xlu0.b32.cont [4/16] %v214, 128
        %244 = vxpose.xlu0.b32.cont [5/16] %v216, 128
        %245 = vxpose.xlu0.b32.cont [6/16] %v218, 128
        %246 = vxpose.xlu0.b32.cont [7/16] %v220, 128
        %247 = vxpose.xlu0.b32.cont [8/16] %v222, 128
        %248 = vxpose.xlu0.b32.cont [9/16] %v224, 128
        %249 = vxpose.xlu0.b32.cont [10/16] %v226, 128
        %250 = vxpose.xlu0.b32.cont [11/16] %v228, 128
        %251 = vxpose.xlu0.b32.cont [12/16] %v230, 128
        %252 = vxpose.xlu0.b32.cont [13/16] %v232, 128
        %253 = vxpose.xlu0.b32.cont [14/16] %v234, 128
        %254 = vxpose.xlu0.b32.cont [15/16] %v236, 128
        %255 = vxpose.xlu0.b32.end [16/16] %v238, 128
        %v256 = vpop.trf.xlu0
        %v257 = vpop.trf.xlu0
        %v258 = vpop.trf.xlu0
        %v259 = vpop.trf.xlu0
        %v260 = vpop.trf.xlu0
        %v261 = vpop.trf.xlu0
        %v262 = vpop.trf.xlu0
        %v263 = vpop.trf.xlu0
        %v264 = vpop.trf.xlu0
        %v265 = vpop.trf.xlu0
        %v266 = vpop.trf.xlu0
        %v267 = vpop.trf.xlu0
        %v268 = vpop.trf.xlu0
        %v269 = vpop.trf.xlu0
        %v270 = vpop.trf.xlu0
        %v271 = vpop.trf.xlu0
        %272 = vxpose.xlu0.b32.start [1/16] %v209, 128
        %273 = vxpose.xlu0.b32.cont [2/16] %v211, 128
        %274 = vxpose.xlu0.b32.cont [3/16] %v213, 128
        %275 = vxpose.xlu0.b32.cont [4/16] %v215, 128
        %276 = vxpose.xlu0.b32.cont [5/16] %v217, 128
        %277 = vxpose.xlu0.b32.cont [6/16] %v219, 128
        %278 = vxpose.xlu0.b32.cont [7/16] %v221, 128
        %279 = vxpose.xlu0.b32.cont [8/16] %v223, 128
        %280 = vxpose.xlu0.b32.cont [9/16] %v225, 128
        %281 = vxpose.xlu0.b32.cont [10/16] %v227, 128
        %282 = vxpose.xlu0.b32.cont [11/16] %v229, 128
        %283 = vxpose.xlu0.b32.cont [12/16] %v231, 128
        %284 = vxpose.xlu0.b32.cont [13/16] %v233, 128
        %285 = vxpose.xlu0.b32.cont [14/16] %v235, 128
        %286 = vxpose.xlu0.b32.cont [15/16] %v237, 128
        %287 = vxpose.xlu0.b32.end [16/16] %v239, 128
        %v288 = vpop.trf.xlu0
        %v289 = vpop.trf.xlu0
        %v290 = vpop.trf.xlu0
        %v291 = vpop.trf.xlu0
        %v292 = vpop.trf.xlu0
        %v293 = vpop.trf.xlu0
        %v294 = vpop.trf.xlu0
        %v295 = vpop.trf.xlu0
        %v296 = vpop.trf.xlu0
        %v297 = vpop.trf.xlu0
        %v298 = vpop.trf.xlu0
        %v299 = vpop.trf.xlu0
        %v300 = vpop.trf.xlu0
        %v301 = vpop.trf.xlu0
        %v302 = vpop.trf.xlu0
        %v303 = vpop.trf.xlu0
        %v304 = vpack.c.bf16 %v257, %v256
        %v305 = vpack.c.bf16 %v259, %v258
        %v306 = vpack.c.bf16 %v261, %v260
        %v307 = vpack.c.bf16 %v263, %v262
        %v308 = vpack.c.bf16 %v265, %v264
        %v309 = vpack.c.bf16 %v267, %v266
        %v310 = vpack.c.bf16 %v269, %v268
        %v311 = vpack.c.bf16 %v271, %v270
        %v312 = vpack.c.bf16 %v289, %v288
        %v313 = vpack.c.bf16 %v291, %v290
        %v314 = vpack.c.bf16 %v293, %v292
        %v315 = vpack.c.bf16 %v295, %v294
        %v316 = vpack.c.bf16 %v297, %v296
        %v317 = vpack.c.bf16 %v299, %v298
        %v318 = vpack.c.bf16 %v301, %v300
        %v319 = vpack.c.bf16 %v303, %v302
        %v320 = vld [vmem:[#allocation5] sm:$0xf]
        %v321 = vld [vmem:[#allocation5 + $0x4] sm:$0xf]
        %v322 = vld [vmem:[#allocation5 + $0x8] sm:$0xf]
        %v323 = vld [vmem:[#allocation5 + $0xc] sm:$0xf]
        %v324 = vld [vmem:[#allocation5 + $0x10] sm:$0xf]
        %v325 = vld [vmem:[#allocation5 + $0x14] sm:$0xf]
        %v326 = vld [vmem:[#allocation5 + $0x18] sm:$0xf]
        %v327 = vld [vmem:[#allocation5 + $0x1c] sm:$0xf]
        %v328 = vld [vmem:[#allocation5 + $0x20] sm:$0xf]
        %v329 = vld [vmem:[#allocation5 + $0x24] sm:$0xf]
        %v330 = vld [vmem:[#allocation5 + $0x28] sm:$0xf]
        %v331 = vld [vmem:[#allocation5 + $0x2c] sm:$0xf]
        %v332 = vld [vmem:[#allocation5 + $0x30] sm:$0xf]
        %v333 = vld [vmem:[#allocation5 + $0x34] sm:$0xf]
        %v334 = vld [vmem:[#allocation5 + $0x38] sm:$0xf]
        %v335 = vld [vmem:[#allocation5 + $0x3c] sm:$0xf]
        %v336 = vld [vmem:[%s2] sm:$0x1]
        %v338 = vperm.slane %v336, 0
        %v356 = vunpack.c.l.b16 %v320
        %v357 = vunpack.c.l.b16 %v321
        %v358 = vunpack.c.l.b16 %v322
        %v359 = vunpack.c.l.b16 %v323
        %v360 = vunpack.c.l.b16 %v324
        %v361 = vunpack.c.l.b16 %v325
        %v362 = vunpack.c.l.b16 %v326
        %v363 = vunpack.c.l.b16 %v327
        %v364 = vunpack.c.l.b16 %v328
        %v365 = vunpack.c.l.b16 %v329
        %v366 = vunpack.c.l.b16 %v330
        %v367 = vunpack.c.l.b16 %v331
        %v368 = vunpack.c.l.b16 %v332
        %v369 = vunpack.c.l.b16 %v333
        %v370 = vunpack.c.l.b16 %v334
        %v371 = vunpack.c.l.b16 %v335
        %v372 = vpack.c.b16 %v357, %v356
        %v373 = vpack.c.b16 %v359, %v358
        %v374 = vpack.c.b16 %v361, %v360
        %v375 = vpack.c.b16 %v363, %v362
        %v376 = vpack.c.b16 %v365, %v364
        %v377 = vpack.c.b16 %v367, %v366
        %v378 = vpack.c.b16 %v369, %v368
        %v379 = vpack.c.b16 %v371, %v370
        %388 = vmatpush.bf16.msra.mxu0 %v379
        %389 = vmatpush.bf16.msra.mxu0 %v378
        %390 = vmatpush.bf16.msra.mxu0 %v377
        %391 = vmatpush.bf16.msra.mxu0 %v376
        %392 = vmatpush.bf16.msra.mxu0 %v375
        %393 = vmatpush.bf16.msra.mxu0 %v374
        %394 = vmatpush.bf16.msra.mxu0 %v373
        %395 = vmatpush.bf16.msra.mxu0 %v372
        %396 = vmatmul.bf16.gmra.mxu0 %v304
        %v397 = vpop.f32.mrf.mxu0
        %v398 = vadd.f32 %v338, %v397
        %v399 = vpop.f32.mrf.mxu0
        %v400 = vadd.f32 %v338, %v399
        %401 = vmatmul.bf16.gmra.mxu0 %v305
        %v402 = vpop.f32.mrf.mxu0
        %v403 = vadd.f32 %v338, %v402
        %v404 = vpop.f32.mrf.mxu0
        %v405 = vadd.f32 %v338, %v404
        %406 = vmatmul.bf16.gmra.mxu0 %v306
        %v407 = vpop.f32.mrf.mxu0
        %v408 = vadd.f32 %v338, %v407
        %v409 = vpop.f32.mrf.mxu0
        %v410 = vadd.f32 %v338, %v409
        %411 = vmatmul.bf16.gmra.mxu0 %v307
        %v412 = vpop.f32.mrf.mxu0
        %v413 = vadd.f32 %v338, %v412
        %v414 = vpop.f32.mrf.mxu0
        %v415 = vadd.f32 %v338, %v414
        %416 = vmatmul.bf16.gmra.mxu0 %v308
        %v417 = vpop.f32.mrf.mxu0
        %v418 = vadd.f32 %v338, %v417
        %v419 = vpop.f32.mrf.mxu0
        %v420 = vadd.f32 %v338, %v419
        %421 = vmatmul.bf16.gmra.mxu0 %v309
        %v422 = vpop.f32.mrf.mxu0
        %v423 = vadd.f32 %v338, %v422
        %v424 = vpop.f32.mrf.mxu0
        %v425 = vadd.f32 %v338, %v424
        %426 = vmatmul.bf16.gmra.mxu0 %v310
        %v427 = vpop.f32.mrf.mxu0
        %v428 = vadd.f32 %v338, %v427
        %v429 = vpop.f32.mrf.mxu0
        %v430 = vadd.f32 %v338, %v429
        %431 = vmatmul.bf16.gmra.mxu0 %v311
        %v432 = vpop.f32.mrf.mxu0
        %v433 = vadd.f32 %v338, %v432
        %v434 = vpop.f32.mrf.mxu0
        %v435 = vadd.f32 %v338, %v434
        %436 = vmatmul.bf16.gmra.mxu0 %v312
        %v437 = vpop.f32.mrf.mxu0
        %v438 = vadd.f32 %v338, %v437
        %v439 = vpop.f32.mrf.mxu0
        %v440 = vadd.f32 %v338, %v439
        %441 = vmatmul.bf16.gmra.mxu0 %v313
        %v442 = vpop.f32.mrf.mxu0
        %v443 = vadd.f32 %v338, %v442
        %v444 = vpop.f32.mrf.mxu0
        %v445 = vadd.f32 %v338, %v444
        %446 = vmatmul.bf16.gmra.mxu0 %v314
        %v447 = vpop.f32.mrf.mxu0
        %v448 = vadd.f32 %v338, %v447
        %v449 = vpop.f32.mrf.mxu0
        %v450 = vadd.f32 %v338, %v449
        %451 = vmatmul.bf16.gmra.mxu0 %v315
        %v452 = vpop.f32.mrf.mxu0
        %v453 = vadd.f32 %v338, %v452
        %v454 = vpop.f32.mrf.mxu0
        %v455 = vadd.f32 %v338, %v454
        %456 = vmatmul.bf16.gmra.mxu0 %v316
        %v457 = vpop.f32.mrf.mxu0
        %v458 = vadd.f32 %v338, %v457
        %v459 = vpop.f32.mrf.mxu0
        %v460 = vadd.f32 %v338, %v459
        %461 = vmatmul.bf16.gmra.mxu0 %v317
        %v462 = vpop.f32.mrf.mxu0
        %v463 = vadd.f32 %v338, %v462
        %v464 = vpop.f32.mrf.mxu0
        %v465 = vadd.f32 %v338, %v464
        %466 = vmatmul.bf16.gmra.mxu0 %v318
        %v467 = vpop.f32.mrf.mxu0
        %v468 = vadd.f32 %v338, %v467
        %v469 = vpop.f32.mrf.mxu0
        %v470 = vadd.f32 %v338, %v469
        %471 = vmatmul.bf16.gmra.mxu0 %v319
        %v472 = vpop.f32.mrf.mxu0
        %v473 = vadd.f32 %v338, %v472
        %v474 = vpop.f32.mrf.mxu0
        %v475 = vadd.f32 %v338, %v474
        %476 = vdwg.mxu0
        %v477 = vmax.f32 %v398, 0.0
        %v478 = vmax.f32 %v400, 0.0
        %v479 = vmax.f32 %v403, 0.0
        %v480 = vmax.f32 %v405, 0.0
        %v481 = vmax.f32 %v408, 0.0
        %v482 = vmax.f32 %v410, 0.0
        %v483 = vmax.f32 %v413, 0.0
        %v484 = vmax.f32 %v415, 0.0
        %v485 = vmax.f32 %v418, 0.0
        %v486 = vmax.f32 %v420, 0.0
        %v487 = vmax.f32 %v423, 0.0
        %v488 = vmax.f32 %v425, 0.0
        %v489 = vmax.f32 %v428, 0.0
        %v490 = vmax.f32 %v430, 0.0
        %v491 = vmax.f32 %v433, 0.0
        %v492 = vmax.f32 %v435, 0.0
        %v493 = vmax.f32 %v438, 0.0
        %v494 = vmax.f32 %v440, 0.0
        %v495 = vmax.f32 %v443, 0.0
        %v496 = vmax.f32 %v445, 0.0
        %v497 = vmax.f32 %v448, 0.0
        %v498 = vmax.f32 %v450, 0.0
        %v499 = vmax.f32 %v453, 0.0
        %v500 = vmax.f32 %v455, 0.0
        %v501 = vmax.f32 %v458, 0.0
        %v502 = vmax.f32 %v460, 0.0
        %v503 = vmax.f32 %v463, 0.0
        %v504 = vmax.f32 %v465, 0.0
        %v505 = vmax.f32 %v468, 0.0
        %v506 = vmax.f32 %v470, 0.0
        %v507 = vmax.f32 %v473, 0.0
        %v508 = vmax.f32 %v475, 0.0
        %v509 = vpack.c.bf16 %v477, %v477
        %v510 = vpack.c.bf16 %v478, %v478
        %v511 = vpack.c.bf16 %v479, %v479
        %v512 = vpack.c.bf16 %v480, %v480
        %v513 = vpack.c.bf16 %v481, %v481
        %v514 = vpack.c.bf16 %v482, %v482
        %v515 = vpack.c.bf16 %v483, %v483
        %v516 = vpack.c.bf16 %v484, %v484
        %v517 = vpack.c.bf16 %v485, %v485
        %v518 = vpack.c.bf16 %v486, %v486
        %v519 = vpack.c.bf16 %v487, %v487
        %v520 = vpack.c.bf16 %v488, %v488
        %v521 = vpack.c.bf16 %v489, %v489
        %v522 = vpack.c.bf16 %v490, %v490
        %v523 = vpack.c.bf16 %v491, %v491
        %v524 = vpack.c.bf16 %v492, %v492
        %v525 = vpack.c.bf16 %v493, %v493
        %v526 = vpack.c.bf16 %v494, %v494
        %v527 = vpack.c.bf16 %v495, %v495
        %v528 = vpack.c.bf16 %v496, %v496
        %v529 = vpack.c.bf16 %v497, %v497
        %v530 = vpack.c.bf16 %v498, %v498
        %v531 = vpack.c.bf16 %v499, %v499
        %v532 = vpack.c.bf16 %v500, %v500
        %v533 = vpack.c.bf16 %v501, %v501
        %v534 = vpack.c.bf16 %v502, %v502
        %v535 = vpack.c.bf16 %v503, %v503
        %v536 = vpack.c.bf16 %v504, %v504
        %v537 = vpack.c.bf16 %v505, %v505
        %v538 = vpack.c.bf16 %v506, %v506
        %v539 = vpack.c.bf16 %v507, %v507
        %v540 = vpack.c.bf16 %v508, %v508
        %541 = vst [vmem:[%s207] sm:$0xf] %v509
        %542 = vst [vmem:[%s207 + $0x4] sm:$0xf] %v510
        %543 = vst [vmem:[%s207 + $0x8] sm:$0xf] %v511
        %544 = vst [vmem:[%s207 + $0xc] sm:$0xf] %v512
        %545 = vst [vmem:[%s207 + $0x10] sm:$0xf] %v513
        %546 = vst [vmem:[%s207 + $0x14] sm:$0xf] %v514
        %547 = vst [vmem:[%s207 + $0x18] sm:$0xf] %v515
        %548 = vst [vmem:[%s207 + $0x1c] sm:$0xf] %v516
        %549 = vst [vmem:[%s207 + $0x20] sm:$0xf] %v517
        %550 = vst [vmem:[%s207 + $0x24] sm:$0xf] %v518
        %551 = vst [vmem:[%s207 + $0x28] sm:$0xf] %v519
        %552 = vst [vmem:[%s207 + $0x2c] sm:$0xf] %v520
        %553 = vst [vmem:[%s207 + $0x30] sm:$0xf] %v521
        %554 = vst [vmem:[%s207 + $0x34] sm:$0xf] %v522
        %555 = vst [vmem:[%s207 + $0x38] sm:$0xf] %v523
        %556 = vst [vmem:[%s207 + $0x3c] sm:$0xf] %v524
        %557 = vst [vmem:[%s207 + $0x40] sm:$0xf] %v525
        %558 = vst [vmem:[%s207 + $0x44] sm:$0xf] %v526
        %559 = vst [vmem:[%s207 + $0x48] sm:$0xf] %v527
        %560 = vst [vmem:[%s207 + $0x4c] sm:$0xf] %v528
        %561 = vst [vmem:[%s207 + $0x50] sm:$0xf] %v529
        %562 = vst [vmem:[%s207 + $0x54] sm:$0xf] %v530
        %563 = vst [vmem:[%s207 + $0x58] sm:$0xf] %v531
        %564 = vst [vmem:[%s207 + $0x5c] sm:$0xf] %v532
        %565 = vst [vmem:[%s207 + $0x60] sm:$0xf] %v533
        %566 = vst [vmem:[%s207 + $0x64] sm:$0xf] %v534
        %567 = vst [vmem:[%s207 + $0x68] sm:$0xf] %v535
        %568 = vst [vmem:[%s207 + $0x6c] sm:$0xf] %v536
        %569 = vst [vmem:[%s207 + $0x70] sm:$0xf] %v537
        %570 = vst [vmem:[%s207 + $0x74] sm:$0xf] %v538
        %571 = vst [vmem:[%s207 + $0x78] sm:$0xf] %v539
        %572 = vst [vmem:[%s207 + $0x7c] sm:$0xf] %v540
        %s573 = sand.u32 %s97, 1
        %s574 = scalar_lea.sflag [#allocation4], %s573
        %s575 = sand.u32 %s97, 1
        %s576 = smul.addr %s575, 128
        %s577 = scalar_lea.vmem [#allocation7], %s576
        // Predicated region
        $region41: #{tpu_custom_call.1} parent=31 // pred_check
          %p578 = pneg %p107
        $region42: #{tpu_custom_call.1} parent=31 // pred_check_branch
          %580 = sbr.rel (%p578) target = $region44
        $region43: #{tpu_custom_call.1} parent=31 // pred_region
          %582 = vsyncadd %s574, 0
          %s583 = smul.addr %s21, 32
          %s584 = smul.addr %s583, 4
          %s585 = scalar_lea.hbm %s3, %s584
          %s586 = sshll.u32 %s577, 4
          %s587 = int_to_ptr.vmem [resolvable:$true] %s586
          %s588 = sshll.u32 %s585, 4
          %s589 = int_to_ptr.hbm [resolvable:$true] %s588
          %594 = dma.vmem_to_hbm [thread:$0]  %s587, 2048, %s589, %s574, 64, 64, 4
        $region44: #{tpu_custom_call.1} parent=31 // pred_fallthru
          _
      $region32: #{tpu_custom_call.1} parent=5 // pred_fallthru
        _
      %p595 = scmp.le.s32.totalorder 2, %s16
      // Predicated region
      $region45: #{tpu_custom_call.1} parent=5 // pred_check
        %p596 = pneg %p595
      $region46: #{tpu_custom_call.1} parent=5 // pred_check_branch
        %598 = sbr.rel (%p596) target = $region48
      $region47: #{tpu_custom_call.1} parent=5 // pred_region
        %s599 = ssub.s32 %s16, 2
        // Predicated region
        $region49: #{tpu_custom_call.1} parent=47 // pred_check
          %p600 = pneg %p113
        $region50: #{tpu_custom_call.1} parent=47 // pred_check_branch
          %602 = sbr.rel (%p600) target = $region52
        $region51: #{tpu_custom_call.1} parent=47 // pred_region
          %s603 = sand.u32 %s98, 1
          %s604 = scalar_lea.sflag [#allocation4], %s603
          %s605 = sand.u32 %s98, 1
          %s606 = smul.addr %s605, 128
          %s607 = scalar_lea.vmem [#allocation7], %s606
          %609 = dma.done %s604, 2048
        $region52: #{tpu_custom_call.1} parent=47 // pred_fallthru
          _
      $region48: #{tpu_custom_call.1} parent=5 // pred_fallthru
        _
    $region6: #{tpu_custom_call.1} parent=1 // loop_footer
      %s20 = sadd.s32 1, %s16
    $region7: #{tpu_custom_call.1} parent=1 // loop_footer_branch
      %15 = sbr.rel target = $region3
    $region8: #{tpu_custom_call.1} parent=1 // loop_exit
      _
    %610 = vsyncpa [#allocation3], 1
    %s611 = scalar_lea.sflag [#allocation3], 1
    %612 = vsyncpa %s611, 1
    %613 = vsyncpa [#allocation6], 1
    %614 = vsyncpa [#allocation4], 1
    %s615 = scalar_lea.sflag [#allocation4], 1
    %616 = vsyncpa %s615, 1

</llo_original>
